<compile_context>
chip_gen: v5e
topology: v5e:2x2
jax: 0.10.0
libtpu: 0.0.40
codegen_flags: <defaults>
</compile_context>

<pallas_src>
import jax
import jax.numpy as jnp
from jax.experimental import pallas as pl
from jax.experimental.pallas import tpu as pltpu


def lstm_model_kernel(qa_ref, img_ref, mask_ref, w1_ref, b1_ref, w2_ref, b2_ref,
                      wih_qa_ref, wih_img_ref, bg_ref, out_ref):
    H = out_ref.shape[-1]          # hidden_dim
    G = wih_qa_ref.shape[-1]       # 3H (f-gate dropped) or 4H (small-H path)

    # embedding_1(QA) / embedding_2(img): two small MXU matmuls (bf16 in, fp32 acc),
    # tanh on the EUP.  Dropout(0.5) == identity (eval mode).
    qa = qa_ref[...].astype(jnp.bfloat16)
    img = img_ref[...].astype(jnp.bfloat16)
    qa_emb = jnp.tanh(
        jnp.dot(qa, w1_ref[...], preferred_element_type=jnp.float32) + b1_ref[...])
    img_emb = jnp.tanh(
        jnp.dot(img, w2_ref[...], preferred_element_type=jnp.float32) + b2_ref[...])

    # questions_mask: exact fp32 broadcast multiply on the QA embedding only.
    qa_emb = qa_emb * mask_ref[...]

    # LSTM gates.  h0 == 0 -> no W_hh matmul; accumulate two matmuls against the
    # split halves of W_ih instead of lane-concatenating [masked_qa, img].
    gates = (
        jnp.dot(qa_emb.astype(jnp.bfloat16), wih_qa_ref[...],
                preferred_element_type=jnp.float32)
        + jnp.dot(img_emb.astype(jnp.bfloat16), wih_img_ref[...],
                  preferred_element_type=jnp.float32)
        + bg_ref[...])

    # Gate nonlinearities stay fp32 (v5e VPU/EUP have no bf16 path).
    # TODO(synk): on v6e/v7x the gate elementwise math could run in bf16.
    if G == 3 * H:
        # Production path (H % 128 == 0): f-gate already dropped wrapper-side,
        # columns are [i | g | o] and lane-aligned -> per-gate activations
        # (minimum transcendental work, no intra-vreg slicing).
        i_g = jax.nn.sigmoid(gates[:, 0:H])
        g_g = jnp.tanh(gates[:, H:2 * H])
        o_g = jax.nn.sigmoid(gates[:, 2 * H:3 * H])
    else:
        # Small-H path (demo H=32): keep 4H == 128 lanes; two full-tile EUP
        # launches + a lane select beat four intra-vreg sliced activations.
        # TODO(synk): for sub-128 production H, pltpu.roll-based lane alignment
        # of the gate quarters would use the idle XLU slot instead of slices.
        sig = jax.nn.sigmoid(gates)
        th = jnp.tanh(gates)
        lane = jax.lax.broadcasted_iota(jnp.int32, gates.shape, 1)
        act = jnp.where((lane >= 2 * H) & (lane < 3 * H), th, sig)
        i_g = act[:, 0:H]
        g_g = act[:, 2 * H:3 * H]
        o_g = act[:, 3 * H:4 * H]

    c = i_g * g_g                       # c0 == 0 -> the f*c0 term drops entirely
    # TODO(synk): if production H < 128, fold batch rows into lanes (or emit bf16)
    # for a lane-dense output store; kept (TB, H) fp32 here to match the module.
    out_ref[...] = (o_g * jnp.tanh(c)).astype(out_ref.dtype)


def _round_up(x, m):
    return ((x + m - 1) // m) * m


def _pick_tile_b(B):
    """Batch tile: big tiles for bandwidth, but >= 2 grid steps for v7x megacore."""
    if B <= 8:
        return B                      # single tiny block (block dim == array dim)
    if B >= 2048:
        return 1024                   # measured HBM-roofline sweet spot (512-1024)
    # mid-size batches: guarantee >= 2 grid iterations so ("parallel",) shards
    # across v7x's 2 TensorCores, rounded up to a sublane multiple.
    return min(1024, _round_up(pl.cdiv(B, 2), 8))


def lstm_model_forward(img_feature, qa_feature, questions_mask, params):
    """Returns lstm_output of shape (B, 1, hidden_dim), matching the PyTorch module."""
    B = img_feature.shape[0]
    E, Hd = params["w1"].shape           # embedding_dim, QA input width (== hidden_dim)
    F = params["w2"].shape[1]            # feature_dim
    H = params["w_hh"].shape[1]          # hidden_dim

    # ---- wrapper-side weight prep (tiny, amortized) ----
    w1t = params["w1"].T.astype(jnp.bfloat16)            # (Hd, E)
    w2t = params["w2"].T.astype(jnp.bfloat16)            # (F, E)
    b1 = params["b1"].reshape(1, E).astype(jnp.float32)
    b2 = params["b2"].reshape(1, E).astype(jnp.float32)

    wih_t = params["w_ih"].T                              # (2E, 4H), gate order i,f,g,o
    bg = (params["b_ih"] + params["b_hh"]).reshape(1, 4 * H)

    drop_f = (H % 128) == 0   # 3H stays lane-aligned -> drop the dead f-gate columns
    if drop_f:
        wih_t = jnp.concatenate(
            [wih_t[:, 0:H], wih_t[:, 2 * H:3 * H], wih_t[:, 3 * H:4 * H]], axis=-1)
        bg = jnp.concatenate(
            [bg[:, 0:H], bg[:, 2 * H:3 * H], bg[:, 3 * H:4 * H]], axis=-1)
    G = wih_t.shape[-1]                                   # 3H or 4H
    wih_qa = wih_t[:E].astype(jnp.bfloat16)               # (E, G)  (masked-QA half)
    wih_img = wih_t[E:].astype(jnp.bfloat16)              # (E, G)  (image half)
    bg = bg.astype(jnp.float32)

    mask2d = questions_mask.reshape(B, 1).astype(jnp.float32)

    TB = _pick_tile_b(B)
    grid = (pl.cdiv(B, TB),)
    resident = lambda i: (0, 0)          # weights / biases stay resident in VMEM

    # VMEM budget: pipelined activation/output tiles + resident weights + headroom.
    vmem_est = (2 * TB * (Hd + F + 1 + H) * 4
                + 2 * ((Hd + F) * E + 2 * E * G) * 2
                + 2 * (2 * E + G) * 4
                + (4 << 20))
    vmem_limit = int(min(64 * 2 ** 20, max(32 * 2 ** 20, vmem_est)))

    # TODO(synk): on v7x, single-buffer the constant-index weight specs via
    # pipeline_mode=pl.Buffered(1) once these weights reach MB scale; at these
    # sizes (KBs) default double-buffering is harmless.
    h_out = pl.pallas_call(
        lstm_model_kernel,
        out_shape=jax.ShapeDtypeStruct((B, H), jnp.float32),
        grid=grid,
        in_specs=[
            pl.BlockSpec((TB, Hd), lambda i: (i, 0)),     # qa_feature: tiled
            pl.BlockSpec((TB, F), lambda i: (i, 0)),      # img_feature: tiled
            pl.BlockSpec((TB, 1), lambda i: (i, 0)),      # questions_mask: tiled
            pl.BlockSpec((Hd, E), resident),              # embedding_1 weight
            pl.BlockSpec((1, E), resident),               # embedding_1 bias
            pl.BlockSpec((F, E), resident),               # embedding_2 weight
            pl.BlockSpec((1, E), resident),               # embedding_2 bias
            pl.BlockSpec((E, G), resident),               # W_ih (QA half)
            pl.BlockSpec((E, G), resident),               # W_ih (image half)
            pl.BlockSpec((1, G), resident),               # b_ih + b_hh
        ],
        out_specs=pl.BlockSpec((TB, H), lambda i: (i, 0)),
        compiler_params=pltpu.CompilerParams(
            dimension_semantics=("parallel",),
            vmem_limit_bytes=vmem_limit),
    )(qa_feature, img_feature, mask2d, w1t, b1, w2t, b2, wih_qa, wih_img, bg)

    # batch_first LSTM output with seq_len == 1
    return h_out.reshape(B, 1, H)


def _reference_forward(img_feature, qa_feature, questions_mask, params):
    """Pure-JAX fp32 reference of the PyTorch forward (eval-mode dropout)."""
    H = params["w_hh"].shape[1]
    qa_emb = jnp.tanh(qa_feature @ params["w1"].T + params["b1"])
    masked_qa = qa_emb * questions_mask[:, None]
    img_emb = jnp.tanh(img_feature @ params["w2"].T + params["b2"])
    x = jnp.concatenate([masked_qa, img_emb], axis=-1)
    gates = x @ params["w_ih"].T + params["b_ih"] + params["b_hh"]
    i = jax.nn.sigmoid(gates[:, 0:H])
    g = jnp.tanh(gates[:, 2 * H:3 * H])
    o = jax.nn.sigmoid(gates[:, 3 * H:4 * H])
    c = i * g                      # c0 == 0
    h = o * jnp.tanh(c)            # h0 == 0
    return h[:, None, :]


def init_params(key, feature_dim, embedding_dim, hidden_dim):
    ks = jax.random.split(key, 8)
    u = lambda k, shape, bound: jax.random.uniform(
        k, shape, jnp.float32, -bound, bound)
    return {
        # embedding_1: Linear(hidden_dim -> embedding_dim)
        "w1": u(ks[0], (embedding_dim, hidden_dim), 1.0 / hidden_dim ** 0.5),
        "b1": u(ks[1], (embedding_dim,), 1.0 / hidden_dim ** 0.5),
        # embedding_2: Linear(feature_dim -> embedding_dim)
        "w2": u(ks[2], (embedding_dim, feature_dim), 1.0 / feature_dim ** 0.5),
        "b2": u(ks[3], (embedding_dim,), 1.0 / feature_dim ** 0.5),
        # LSTM(2*embedding_dim -> hidden_dim)
        "w_ih": u(ks[4], (4 * hidden_dim, 2 * embedding_dim), 1.0 / hidden_dim ** 0.5),
        "w_hh": u(ks[5], (4 * hidden_dim, hidden_dim), 1.0 / hidden_dim ** 0.5),
        "b_ih": u(ks[6], (4 * hidden_dim,), 1.0 / hidden_dim ** 0.5),
        "b_hh": u(ks[7], (4 * hidden_dim,), 1.0 / hidden_dim ** 0.5),
    }


def _run_case(key, B, feature_dim, embedding_dim, hidden_dim):
    k_img, k_qa, k_mask, k_par = jax.random.split(key, 4)
    img_feature = jax.random.normal(k_img, (B, feature_dim), jnp.float32)
    qa_feature = jax.random.normal(k_qa, (B, hidden_dim), jnp.float32)
    questions_mask = (jax.random.uniform(k_mask, (B,)) > 0.3).astype(jnp.float32)
    params = init_params(k_par, feature_dim, embedding_dim, hidden_dim)

    out = jax.block_until_ready(
        lstm_model_forward(img_feature, qa_feature, questions_mask, params))
    ref = _reference_forward(img_feature, qa_feature, questions_mask, params)
    assert out.shape == (B, 1, hidden_dim)
    # bf16 MXU operands -> loosened tolerance vs fp32 reference (intentional)
    assert jnp.allclose(out, ref, atol=5e-2, rtol=5e-2)


if __name__ == "__main__":
    key = jax.random.PRNGKey(0)
    k_small, k_big = jax.random.split(key, 2)

    # Small demo config (H=32 < 128: 4H == 128-lane gate path, single grid step).
    _run_case(k_small, B=2, feature_dim=64, embedding_dim=32, hidden_dim=32)

    # Production-path config (H % 128 == 0: f-gate dropped, per-gate lane-aligned
    # activations, >= 2 grid steps for megacore, non-divisible batch tail masking).
    _run_case(k_big, B=200, feature_dim=256, embedding_dim=128, hidden_dim=128)

    print("KERNEL_OK")
</pallas_src>

<mosaic_0001>
module attributes {stable_mosaic.version = 11 : i64} {
  func.func @lstm_model_kernel(%arg0: i32, %arg1: memref<2x32xf32, #tpu.memory_space<vmem>>, %arg2: memref<2x64xf32, #tpu.memory_space<vmem>>, %arg3: memref<2x1xf32, #tpu.memory_space<vmem>>, %arg4: memref<32x32xbf16, #tpu.memory_space<vmem>>, %arg5: memref<1x32xf32, #tpu.memory_space<vmem>>, %arg6: memref<64x32xbf16, #tpu.memory_space<vmem>>, %arg7: memref<1x32xf32, #tpu.memory_space<vmem>>, %arg8: memref<32x128xbf16, #tpu.memory_space<vmem>>, %arg9: memref<32x128xbf16, #tpu.memory_space<vmem>>, %arg10: memref<1x128xf32, #tpu.memory_space<vmem>>, %arg11: memref<2x32xf32, #tpu.memory_space<vmem>>) attributes {dimension_semantics = [#tpu.dimension_semantics<parallel>], iteration_bounds = array<i64: 1>, scalar_prefetch = 0 : i64, scratch_operands = 0 : i64, tpu.core_type = #tpu.core_type<tc>, window_params = [{transform_indices = @transform_0, window_bounds = array<i64: 2, 32>}, {transform_indices = @transform_1, window_bounds = array<i64: 2, 64>}, {transform_indices = @transform_2, window_bounds = array<i64: 2, 1>}, {pipeline_mode = #tpu.pipeline_mode<synchronous>, transform_indices = @transform_3, window_bounds = array<i64: 32, 32>}, {pipeline_mode = #tpu.pipeline_mode<synchronous>, transform_indices = @transform_4, window_bounds = array<i64: 1, 32>}, {pipeline_mode = #tpu.pipeline_mode<synchronous>, transform_indices = @transform_5, window_bounds = array<i64: 64, 32>}, {pipeline_mode = #tpu.pipeline_mode<synchronous>, transform_indices = @transform_6, window_bounds = array<i64: 1, 32>}, {pipeline_mode = #tpu.pipeline_mode<synchronous>, transform_indices = @transform_7, window_bounds = array<i64: 32, 128>}, {pipeline_mode = #tpu.pipeline_mode<synchronous>, transform_indices = @transform_8, window_bounds = array<i64: 32, 128>}, {pipeline_mode = #tpu.pipeline_mode<synchronous>, transform_indices = @transform_9, window_bounds = array<i64: 1, 128>}, {transform_indices = @transform_10, window_bounds = array<i64: 2, 32>}]} {
    %c0 = arith.constant 0 : index
    %c0_0 = arith.constant 0 : index
    %0 = vector.load %arg1[%c0, %c0_0] : memref<2x32xf32, #tpu.memory_space<vmem>>, vector<2x32xf32>
    %1 = arith.truncf %0 : vector<2x32xf32> to vector<2x32xbf16>
    %c0_1 = arith.constant 0 : index
    %c0_2 = arith.constant 0 : index
    %2 = vector.load %arg2[%c0_1, %c0_2] : memref<2x64xf32, #tpu.memory_space<vmem>>, vector<2x64xf32>
    %3 = arith.truncf %2 : vector<2x64xf32> to vector<2x64xbf16>
    %c0_3 = arith.constant 0 : index
    %c0_4 = arith.constant 0 : index
    %4 = vector.load %arg4[%c0_3, %c0_4] : memref<32x32xbf16, #tpu.memory_space<vmem>>, vector<32x32xbf16>
    %cst = arith.constant dense<0.000000e+00> : vector<2x32xf32>
    %5 = tpu.matmul %1, %4, %cst {dimension_numbers = #tpu.dot_dimension_numbers<[1], [0], [0], [1], [0, 0, 1, 1], [], []>} : vector<2x32xbf16>, vector<32x32xbf16>, vector<2x32xf32> -> vector<2x32xf32>
    %c0_5 = arith.constant 0 : index
    %c0_6 = arith.constant 0 : index
    %6 = vector.load %arg5[%c0_5, %c0_6] : memref<1x32xf32, #tpu.memory_space<vmem>>, vector<1x32xf32>
    %7 = vector.broadcast %6 : vector<1x32xf32> to vector<2x32xf32>
    %8 = arith.addf %5, %7 : vector<2x32xf32>
    %9 = math.tanh %8 : vector<2x32xf32>
    %c0_7 = arith.constant 0 : index
    %c0_8 = arith.constant 0 : index
    %10 = vector.load %arg6[%c0_7, %c0_8] : memref<64x32xbf16, #tpu.memory_space<vmem>>, vector<64x32xbf16>
    %cst_9 = arith.constant dense<0.000000e+00> : vector<2x32xf32>
    %11 = tpu.matmul %3, %10, %cst_9 {dimension_numbers = #tpu.dot_dimension_numbers<[1], [0], [0], [1], [0, 0, 1, 1], [], []>} : vector<2x64xbf16>, vector<64x32xbf16>, vector<2x32xf32> -> vector<2x32xf32>
    %c0_10 = arith.constant 0 : index
    %c0_11 = arith.constant 0 : index
    %12 = vector.load %arg7[%c0_10, %c0_11] : memref<1x32xf32, #tpu.memory_space<vmem>>, vector<1x32xf32>
    %13 = vector.broadcast %12 : vector<1x32xf32> to vector<2x32xf32>
    %14 = arith.addf %11, %13 : vector<2x32xf32>
    %15 = math.tanh %14 : vector<2x32xf32>
    %c0_12 = arith.constant 0 : index
    %c0_13 = arith.constant 0 : index
    %16 = vector.load %arg3[%c0_12, %c0_13] : memref<2x1xf32, #tpu.memory_space<vmem>>, vector<2x1xf32>
    %17 = vector.broadcast %16 : vector<2x1xf32> to vector<2x32xf32>
    %18 = arith.mulf %9, %17 : vector<2x32xf32>
    %19 = arith.truncf %18 : vector<2x32xf32> to vector<2x32xbf16>
    %c0_14 = arith.constant 0 : index
    %c0_15 = arith.constant 0 : index
    %20 = vector.load %arg8[%c0_14, %c0_15] : memref<32x128xbf16, #tpu.memory_space<vmem>>, vector<32x128xbf16>
    %cst_16 = arith.constant dense<0.000000e+00> : vector<2x128xf32>
    %21 = tpu.matmul %19, %20, %cst_16 {dimension_numbers = #tpu.dot_dimension_numbers<[1], [0], [0], [1], [0, 0, 1, 1], [], []>} : vector<2x32xbf16>, vector<32x128xbf16>, vector<2x128xf32> -> vector<2x128xf32>
    %22 = arith.truncf %15 : vector<2x32xf32> to vector<2x32xbf16>
    %c0_17 = arith.constant 0 : index
    %c0_18 = arith.constant 0 : index
    %23 = vector.load %arg9[%c0_17, %c0_18] : memref<32x128xbf16, #tpu.memory_space<vmem>>, vector<32x128xbf16>
    %cst_19 = arith.constant dense<0.000000e+00> : vector<2x128xf32>
    %24 = tpu.matmul %22, %23, %cst_19 {dimension_numbers = #tpu.dot_dimension_numbers<[1], [0], [0], [1], [0, 0, 1, 1], [], []>} : vector<2x32xbf16>, vector<32x128xbf16>, vector<2x128xf32> -> vector<2x128xf32>
    %25 = arith.addf %21, %24 : vector<2x128xf32>
    %c0_20 = arith.constant 0 : index
    %c0_21 = arith.constant 0 : index
    %26 = vector.load %arg10[%c0_20, %c0_21] : memref<1x128xf32, #tpu.memory_space<vmem>>, vector<1x128xf32>
    %27 = vector.broadcast %26 : vector<1x128xf32> to vector<2x128xf32>
    %28 = arith.addf %25, %27 : vector<2x128xf32>
    %29 = arith.negf %28 : vector<2x128xf32>
    %30 = math.exp %29 : vector<2x128xf32>
    %cst_22 = arith.constant 1.000000e+00 : f32
    %31 = vector.broadcast %cst_22 : f32 to vector<2x128xf32>
    %32 = arith.addf %31, %30 : vector<2x128xf32>
    %33 = arith.divf %31, %32 : vector<2x128xf32>
    %34 = math.tanh %28 : vector<2x128xf32>
    %35 = tpu.iota {dimensions = array<i32: 1>} : vector<2x128xi32>
    %c64_i32 = arith.constant 64 : i32
    %36 = vector.broadcast %c64_i32 : i32 to vector<2x128xi32>
    %37 = arith.cmpi sge, %35, %36 : vector<2x128xi32>
    %c96_i32 = arith.constant 96 : i32
    %38 = vector.broadcast %c96_i32 : i32 to vector<2x128xi32>
    %39 = arith.cmpi slt, %35, %38 : vector<2x128xi32>
    %40 = arith.andi %37, %39 : vector<2x128xi1>
    %41 = arith.select %40, %34, %33 : vector<2x128xi1>, vector<2x128xf32>
    %42 = vector.extract_strided_slice %41 {offsets = [0, 0], sizes = [2, 32], strides = [1, 1]} : vector<2x128xf32> to vector<2x32xf32>
    %43 = vector.extract_strided_slice %41 {offsets = [0, 64], sizes = [2, 32], strides = [1, 1]} : vector<2x128xf32> to vector<2x32xf32>
    %44 = vector.extract_strided_slice %41 {offsets = [0, 96], sizes = [2, 32], strides = [1, 1]} : vector<2x128xf32> to vector<2x32xf32>
    %45 = arith.mulf %42, %43 : vector<2x32xf32>
    %46 = math.tanh %45 : vector<2x32xf32>
    %47 = arith.mulf %44, %46 : vector<2x32xf32>
    %c0_23 = arith.constant 0 : index
    %c0_24 = arith.constant 0 : index
    %48 = vector.load %arg11[%c0_23, %c0_24] : memref<2x32xf32, #tpu.memory_space<vmem>>, vector<2x32xf32>
    tpu.vector_store %arg11[%c0_23, %c0_24], %47 {strides = array<i32>} : memref<2x32xf32, #tpu.memory_space<vmem>>, vector<2x32xf32>,
    return
  }
  func.func @transform_0(%arg0: i32) -> (i32, i32) {
    %c0_i32 = arith.constant 0 : i32
    %c0_i32_0 = arith.constant 0 : i32
    return %arg0, %c0_i32 : i32, i32
  }
  func.func @transform_1(%arg0: i32) -> (i32, i32) {
    %c0_i32 = arith.constant 0 : i32
    %c0_i32_0 = arith.constant 0 : i32
    return %arg0, %c0_i32 : i32, i32
  }
  func.func @transform_2(%arg0: i32) -> (i32, i32) {
    %c0_i32 = arith.constant 0 : i32
    %c0_i32_0 = arith.constant 0 : i32
    return %arg0, %c0_i32 : i32, i32
  }
  func.func @transform_3(%arg0: i32) -> (i32, i32) {
    %c0_i32 = arith.constant 0 : i32
    %c0_i32_0 = arith.constant 0 : i32
    %c0_i32_1 = arith.constant 0 : i32
    return %c0_i32, %c0_i32_0 : i32, i32
  }
  func.func @transform_4(%arg0: i32) -> (i32, i32) {
    %c0_i32 = arith.constant 0 : i32
    %c0_i32_0 = arith.constant 0 : i32
    %c0_i32_1 = arith.constant 0 : i32
    return %c0_i32, %c0_i32_0 : i32, i32
  }
  func.func @transform_5(%arg0: i32) -> (i32, i32) {
    %c0_i32 = arith.constant 0 : i32
    %c0_i32_0 = arith.constant 0 : i32
    %c0_i32_1 = arith.constant 0 : i32
    return %c0_i32, %c0_i32_0 : i32, i32
  }
  func.func @transform_6(%arg0: i32) -> (i32, i32) {
    %c0_i32 = arith.constant 0 : i32
    %c0_i32_0 = arith.constant 0 : i32
    %c0_i32_1 = arith.constant 0 : i32
    return %c0_i32, %c0_i32_0 : i32, i32
  }
  func.func @transform_7(%arg0: i32) -> (i32, i32) {
    %c0_i32 = arith.constant 0 : i32
    %c0_i32_0 = arith.constant 0 : i32
    %c0_i32_1 = arith.constant 0 : i32
    return %c0_i32, %c0_i32_0 : i32, i32
  }
  func.func @transform_8(%arg0: i32) -> (i32, i32) {
    %c0_i32 = arith.constant 0 : i32
    %c0_i32_0 = arith.constant 0 : i32
    %c0_i32_1 = arith.constant 0 : i32
    return %c0_i32, %c0_i32_0 : i32, i32
  }
  func.func @transform_9(%arg0: i32) -> (i32, i32) {
    %c0_i32 = arith.constant 0 : i32
    %c0_i32_0 = arith.constant 0 : i32
    %c0_i32_1 = arith.constant 0 : i32
    return %c0_i32, %c0_i32_0 : i32, i32
  }
  func.func @transform_10(%arg0: i32) -> (i32, i32) {
    %c0_i32 = arith.constant 0 : i32
    %c0_i32_0 = arith.constant 0 : i32
    return %arg0, %c0_i32 : i32, i32
  }
}

</mosaic_0001>

<llo_original>
// kernel: tpu_custom_call.1
$region0: #{tpu_custom_call.1}
  #allocation0 [shape = 'u32[]', space=smem, size = 0x4, offset = 0x4, fixed_abs, tag = 'smem constant byte address 0x4 - core index']
  #allocation1 [shape = 'u32[72,128]{1,0:T(1,128)}', space=vmem, size = 0x9000, scoped, tag = 'internal scratch']
  %s0 = inlined_call_operand.vmem [shape: f32[2,32], index: 0, kind: input, shape index: {}]
  %s1 = inlined_call_operand.hbm [shape: f32[2,64], index: 1, kind: input, shape index: {}]
  %s2 = inlined_call_operand.vmem [shape: f32[2,1], index: 2, kind: input, shape index: {}]
  %s3 = inlined_call_operand.vmem [shape: bf16[32,32], index: 3, kind: input, shape index: {}]
  %s4 = inlined_call_operand.vmem [shape: f32[1,32], index: 4, kind: input, shape index: {}]
  %s5 = inlined_call_operand.vmem [shape: bf16[64,32], index: 5, kind: input, shape index: {}]
  %s6 = inlined_call_operand.vmem [shape: f32[1,32], index: 6, kind: input, shape index: {}]
  %s7 = inlined_call_operand.vmem [shape: bf16[32,128], index: 7, kind: input, shape index: {}]
  %s8 = inlined_call_operand.vmem [shape: bf16[32,128], index: 8, kind: input, shape index: {}]
  %s9 = inlined_call_operand.vmem [shape: f32[1,128], index: 9, kind: input, shape index: {}]
  %s10 = inlined_call_operand.hbm [shape: f32[2,32], index: 10, kind: output, shape index: {}]
  %s11 = sld [smem:[#allocation0]]
  $region54: #{tpu_custom_call.1} parent=0
    _
  %s13 = ssub.s32 1, %s11
  %s14 = scalar_select 0, %s13, %s11
  $region1: #{tpu_custom_call.1} parent=0
    #allocation2 [shape = 'u8[1024]{0}', space=vmem, size = 0x400, scoped, tag = 'input window, operand 1, single buffered']
    #allocation3 [shape = 's32[1]{0}', space=sflag, size = 0x4, scoped, tag = 'scoped memory for tpu_custom_call.1']
    #allocation4 [shape = 's32[1]{0}', space=sflag, size = 0x4, scoped, tag = 'scoped memory for tpu_custom_call.1']
    #allocation5 [shape = 'u8[1024]{0}', space=vmem, size = 0x400, scoped, tag = 'output window, operand 0, single buffered']
    %15 = vsyncpa [#allocation3], 0
    %16 = vsyncpa [#allocation4], 0
    // Predicated region
    $region2: #{tpu_custom_call.1} parent=1 // pred_check
      _
    $region3: #{tpu_custom_call.1} parent=1 // pred_check_branch
      %18 = sbr.rel (0) target = $region5
    $region4: #{tpu_custom_call.1} parent=1 // pred_region
      _
    $region5: #{tpu_custom_call.1} parent=1 // pred_fallthru
      _
    // Predicated region
    $region6: #{tpu_custom_call.1} parent=1 // pred_check
      _
    $region7: #{tpu_custom_call.1} parent=1 // pred_check_branch
      %20 = sbr.rel (0) target = $region9
    $region8: #{tpu_custom_call.1} parent=1 // pred_region
      %22 = vsyncadd [#allocation3], 0
      %s24 = sshll.u32 %s1, 4
      %s25 = int_to_ptr.hbm [resolvable:$true] %s24
      %s26 = sshll.u32 [#allocation2], 4
      %s27 = int_to_ptr.vmem [resolvable:$true] %s26
      %29 = dma.hbm_to_vmem [thread:$0]  %s25, 32, %s27, [#allocation3]
    $region9: #{tpu_custom_call.1} parent=1 // pred_fallthru
      _
    // Predicated region
    $region10: #{tpu_custom_call.1} parent=1 // pred_check
      _
    $region11: #{tpu_custom_call.1} parent=1 // pred_check_branch
      %31 = sbr.rel (0) target = $region13
    $region12: #{tpu_custom_call.1} parent=1 // pred_region
      _
    $region13: #{tpu_custom_call.1} parent=1 // pred_fallthru
      _
    // Predicated region
    $region14: #{tpu_custom_call.1} parent=1 // pred_check
      _
    $region15: #{tpu_custom_call.1} parent=1 // pred_check_branch
      %33 = sbr.rel (0) target = $region17
    $region16: #{tpu_custom_call.1} parent=1 // pred_region
      _
    $region17: #{tpu_custom_call.1} parent=1 // pred_fallthru
      _
    // Predicated region
    $region18: #{tpu_custom_call.1} parent=1 // pred_check
      _
    $region19: #{tpu_custom_call.1} parent=1 // pred_check_branch
      %35 = sbr.rel (0) target = $region21
    $region20: #{tpu_custom_call.1} parent=1 // pred_region
      _
    $region21: #{tpu_custom_call.1} parent=1 // pred_fallthru
      _
    // Predicated region
    $region22: #{tpu_custom_call.1} parent=1 // pred_check
      _
    $region23: #{tpu_custom_call.1} parent=1 // pred_check_branch
      %37 = sbr.rel (0) target = $region25
    $region24: #{tpu_custom_call.1} parent=1 // pred_region
      _
    $region25: #{tpu_custom_call.1} parent=1 // pred_fallthru
      _
    // Predicated region
    $region26: #{tpu_custom_call.1} parent=1 // pred_check
      _
    $region27: #{tpu_custom_call.1} parent=1 // pred_check_branch
      %39 = sbr.rel (0) target = $region29
    $region28: #{tpu_custom_call.1} parent=1 // pred_region
      _
    $region29: #{tpu_custom_call.1} parent=1 // pred_fallthru
      _
    // Predicated region
    $region30: #{tpu_custom_call.1} parent=1 // pred_check
      _
    $region31: #{tpu_custom_call.1} parent=1 // pred_check_branch
      %41 = sbr.rel (0) target = $region33
    $region32: #{tpu_custom_call.1} parent=1 // pred_region
      _
    $region33: #{tpu_custom_call.1} parent=1 // pred_fallthru
      _
    // Predicated region
    $region34: #{tpu_custom_call.1} parent=1 // pred_check
      _
    $region35: #{tpu_custom_call.1} parent=1 // pred_check_branch
      %43 = sbr.rel (0) target = $region37
    $region36: #{tpu_custom_call.1} parent=1 // pred_region
      _
    $region37: #{tpu_custom_call.1} parent=1 // pred_fallthru
      _
    // Predicated region
    $region38: #{tpu_custom_call.1} parent=1 // pred_check
      _
    $region39: #{tpu_custom_call.1} parent=1 // pred_check_branch
      %45 = sbr.rel (0) target = $region41
    $region40: #{tpu_custom_call.1} parent=1 // pred_region
      _
    $region41: #{tpu_custom_call.1} parent=1 // pred_fallthru
      _
    // Predicated region
    $region42: #{tpu_custom_call.1} parent=1 // pred_check
      _
    $region43: #{tpu_custom_call.1} parent=1 // pred_check_branch
      %47 = sbr.rel (0) target = $region45
    $region44: #{tpu_custom_call.1} parent=1 // pred_region
      %49 = dma.done [#allocation3], 32
    $region45: #{tpu_custom_call.1} parent=1 // pred_fallthru
      _
    %v51 = vld [vmem:[%s0] sm:$0x3]
    %v52 = vpack.c.bf16 %v51, %v51
    %v53 = vld [vmem:[#allocation2] sm:$0x3]
    %v54 = vpack.c.bf16 %v53, %v53
    %v55 = vld [vmem:[%s3] sm:$0xf]
    %v56 = vld [vmem:[%s3 + $0x4] sm:$0xf]
    %v57 = vld [vmem:[%s3 + $0x8] sm:$0xf]
    %v58 = vld [vmem:[%s3 + $0xc] sm:$0xf]
    %v59 = vld [vmem:[%s4] sm:$0x1]
    %v61 = vperm.slane %v59, 0
    %v67 = vunpack.c.l.b16 %v55
    %v68 = vunpack.c.l.b16 %v56
    %v69 = vunpack.c.l.b16 %v57
    %v70 = vunpack.c.l.b16 %v58
    %v71 = vpack.c.b16 %v68, %v67
    %v72 = vpack.c.b16 %v70, %v69
    %vm75 = vcmask 261120
    %v77 = vsel %vm75, %v52, 0
    %79 = vmatpush.bf16.msra.mxu0 0
    %80 = vmatpush.bf16.msra.mxu0 0
    %81 = vmatpush.bf16.msra.mxu0 0
    %82 = vmatpush.bf16.msra.mxu0 0
    %83 = vmatpush.bf16.msra.mxu0 0
    %84 = vmatpush.bf16.msra.mxu0 0
    %85 = vmatpush.bf16.msra.mxu0 %v72
    %86 = vmatpush.bf16.msra.mxu0 %v71
    %87 = vmatmul.bf16.gmra.mxu0 %v77
    %v88 = vpop.f32.mrf.mxu0
    %v89 = vadd.f32 %v61, %v88
    %v90 = vpop.f32.mrf.mxu0
    %91 = vdwg.mxu0
    %v92 = vtanh.pop %v89
    %v93 = vld [vmem:[%s5] sm:$0xf]
    %v94 = vld [vmem:[%s5 + $0x4] sm:$0xf]
    %v95 = vld [vmem:[%s5 + $0x8] sm:$0xf]
    %v96 = vld [vmem:[%s5 + $0xc] sm:$0xf]
    %v97 = vld [vmem:[%s5 + $0x10] sm:$0xf]
    %v98 = vld [vmem:[%s5 + $0x14] sm:$0xf]
    %v99 = vld [vmem:[%s5 + $0x18] sm:$0xf]
    %v100 = vld [vmem:[%s5 + $0x1c] sm:$0xf]
    %v101 = vld [vmem:[%s6] sm:$0x1]
    %v103 = vperm.slane %v101, 0
    %v113 = vunpack.c.l.b16 %v93
    %v114 = vunpack.c.l.b16 %v94
    %v115 = vunpack.c.l.b16 %v95
    %v116 = vunpack.c.l.b16 %v96
    %v117 = vunpack.c.l.b16 %v97
    %v118 = vunpack.c.l.b16 %v98
    %v119 = vunpack.c.l.b16 %v99
    %v120 = vunpack.c.l.b16 %v100
    %v121 = vpack.c.b16 %v114, %v113
    %v122 = vpack.c.b16 %v116, %v115
    %v123 = vpack.c.b16 %v118, %v117
    %v124 = vpack.c.b16 %v120, %v119
    %vm129 = vcmask 523264
    %v131 = vsel %vm129, %v54, 0
    %133 = vmatpush.bf16.msra.mxu0 0
    %134 = vmatpush.bf16.msra.mxu0 0
    %135 = vmatpush.bf16.msra.mxu0 0
    %136 = vmatpush.bf16.msra.mxu0 0
    %137 = vmatpush.bf16.msra.mxu0 %v124
    %138 = vmatpush.bf16.msra.mxu0 %v123
    %139 = vmatpush.bf16.msra.mxu0 %v122
    %140 = vmatpush.bf16.msra.mxu0 %v121
    %141 = vmatmul.bf16.gmra.mxu0 %v131
    %v142 = vpop.f32.mrf.mxu0
    %v143 = vadd.f32 %v103, %v142
    %v144 = vpop.f32.mrf.mxu0
    %145 = vdwg.mxu0
    %v146 = vtanh.pop %v143
    %v147 = vld [vmem:[%s2] sm:$0x3]
    %149 = vset.pattern.permute.xlu0 0
    %150 = vperm.xlu0 %149, %v147
    %v151 = vpop.permute.xlu0 %150
    %v153 = vmul.f32 %v92, %v151
    %v154 = vpack.c.bf16 %v153, %v153
    %v155 = vld [vmem:[%s7] sm:$0xf]
    %v156 = vld [vmem:[%s7 + $0x4] sm:$0xf]
    %v157 = vld [vmem:[%s7 + $0x8] sm:$0xf]
    %v158 = vld [vmem:[%s7 + $0xc] sm:$0xf]
    %v159 = vpack.c.bf16 %v146, %v146
    %v160 = vld [vmem:[%s8] sm:$0xf]
    %v161 = vld [vmem:[%s8 + $0x4] sm:$0xf]
    %v162 = vld [vmem:[%s8 + $0x8] sm:$0xf]
    %v163 = vld [vmem:[%s8 + $0xc] sm:$0xf]
    %v168 = vunpack.c.l.b16 %v160
    %v169 = vunpack.c.l.b16 %v161
    %v170 = vunpack.c.l.b16 %v162
    %v171 = vunpack.c.l.b16 %v163
    %v172 = vpack.c.b16 %v169, %v168
    %v173 = vpack.c.b16 %v171, %v170
    %v177 = vsel %vm75, %v159, 0
    %179 = vmatpush.bf16.msra.mxu0 0
    %180 = vmatpush.bf16.msra.mxu0 0
    %181 = vmatpush.bf16.msra.mxu0 0
    %182 = vmatpush.bf16.msra.mxu0 0
    %183 = vmatpush.bf16.msra.mxu0 0
    %184 = vmatpush.bf16.msra.mxu0 0
    %185 = vmatpush.bf16.msra.mxu0 %v173
    %186 = vmatpush.bf16.msra.mxu0 %v172
    %187 = vmatmul.bf16.gmra.mxu0 %v177
    %v188 = vpop.f32.mrf.mxu0
    %v189 = vadd.f32 0.0, %v188
    %v190 = vpop.f32.mrf.mxu0
    %191 = vdwg.mxu0
    %v196 = vunpack.c.l.b16 %v155
    %v197 = vunpack.c.l.b16 %v156
    %v198 = vunpack.c.l.b16 %v157
    %v199 = vunpack.c.l.b16 %v158
    %v200 = vpack.c.b16 %v197, %v196
    %v201 = vpack.c.b16 %v199, %v198
    %v205 = vsel %vm75, %v154, 0
    %207 = vmatpush.bf16.msra.mxu0 0
    %208 = vmatpush.bf16.msra.mxu0 0
    %209 = vmatpush.bf16.msra.mxu0 0
    %210 = vmatpush.bf16.msra.mxu0 0
    %211 = vmatpush.bf16.msra.mxu0 0
    %212 = vmatpush.bf16.msra.mxu0 0
    %213 = vmatpush.bf16.msra.mxu0 %v201
    %214 = vmatpush.bf16.msra.mxu0 %v200
    %215 = vmatmul.bf16.gmra.mxu0 %v205
    %v216 = vpop.f32.mrf.mxu0
    %v217 = vadd.f32 %v189, %v216
    %v218 = vpop.f32.mrf.mxu0
    %219 = vdwg.mxu0
    %v220 = vld [vmem:[%s9] sm:$0x1]
    %v222 = vperm.slane %v220, 0
    %v224 = vadd.f32 %v217, %v222
    %v225 = vxor.u32 %v224, 2147483648
    %v226 = vmul.f32 %v225, 1.442695
    %v227 = vpow.pop %v226
    %v228 = vadd.f32 %v227, 1.0
    %v229 = vrcp.pop %v228
    %v230 = vmul.f32 %v228, %v229
    %v231 = vsub.f32 1.0, %v230
    %v232 = vmul.f32 %v229, %v231
    %v233 = vadd.f32 %v229, %v232
    %vm234 = vweird.f32 %v228
    %vm235 = vweird.f32 %v229
    %vm236 = vmor %vm234, %vm235
    %v237 = vsel %vm236, %v229, %v233
    %v238 = vand.u32 2147483647, %v228
    %vm239 = vcmp.eq.f32.partialorder %v238, 8.507059e+37
    %v240 = vand.u32 %v228, 2147483648
    %v241 = vor.u32 1.1754944e-38, %v240
    %v242 = vsel %vm239, %v241, %v237
    %v243 = vmul.f32 1.0, %v242
    %v244 = vtanh.pop %v224
    %v245 = vlaneseq
    %v246 = vand.u32 %v245, 127
    %vm247 = vcmp.ge.s32.totalorder %v246, 64
    %vm248 = vcmp.lt.s32.totalorder %v246, 96
    %vm249 = vmand %vm247, %vm248
    %v250 = vsel %vm249, %v244, %v243
    %252 = vrot.lane.b32.xlu0 %v250, 64
    %v253 = vpop.permute.xlu0 %252
    %v255 = vmul.f32 %v250, %v253
    %v256 = vtanh.pop %v255
    %258 = vrot.lane.b32.xlu0 %v256, 96
    %v259 = vpop.permute.xlu0 %258
    %v261 = vmul.f32 %v250, %v259
    %263 = vrot.lane.b32.xlu0 %v261, 32
    %v264 = vpop.permute.xlu0 %263
    %vm266 = vcmask 254976
    %267 = vst.msk [vmem:[#allocation5] sm:$0x3] %vm266, %v264
    // Predicated region
    $region46: #{tpu_custom_call.1} parent=1 // pred_check
      _
    $region47: #{tpu_custom_call.1} parent=1 // pred_check_branch
      %269 = sbr.rel (0) target = $region49
    $region48: #{tpu_custom_call.1} parent=1 // pred_region
      %271 = vsyncadd [#allocation4], 0
      %s273 = sshll.u32 [#allocation5], 4
      %s274 = int_to_ptr.vmem [resolvable:$true] %s273
      %s275 = sshll.u32 %s10, 4
      %s276 = int_to_ptr.hbm [resolvable:$true] %s275
      %278 = dma.vmem_to_hbm [thread:$0]  %s274, 32, %s276, [#allocation4]
    $region49: #{tpu_custom_call.1} parent=1 // pred_fallthru
      _
    // Predicated region
    $region50: #{tpu_custom_call.1} parent=1 // pred_check
      _
    $region51: #{tpu_custom_call.1} parent=1 // pred_check_branch
      %280 = sbr.rel (0) target = $region53
    $region52: #{tpu_custom_call.1} parent=1 // pred_region
      %282 = dma.done [#allocation4], 32
    $region53: #{tpu_custom_call.1} parent=1 // pred_fallthru
      _
    %283 = vsyncpa [#allocation3], 1
    %284 = vsyncpa [#allocation4], 1

</llo_original>
